<compile_context>
chip_gen: v7x
topology: tpu7x:2x2x1
jax: 0.10.0
libtpu: 0.0.40
codegen_flags: <defaults>
</compile_context>

<pallas_src>
import jax
import jax.numpy as jnp
from jax.experimental import pallas as pl
from jax.experimental.pallas import tpu as pltpu


def _round_up(x, m):
    return ((x + m - 1) // m) * m


# ---------------------------------------------------------------------------
# Kernels
# ---------------------------------------------------------------------------
def _gnn_ah_kernel(a_ref, h_ref, o_ref):
    """y = A @ H accumulated directly into the resident f32 output block;
    relu(y) + y applied in the last-k epilogue."""
    k = pl.program_id(1)

    @pl.when(k == 0)
    def _():
        o_ref[...] = jnp.zeros_like(o_ref)

    o_ref[...] += jnp.dot(a_ref[...], h_ref[...],
                          preferred_element_type=jnp.float32)

    @pl.when(k == pl.num_programs(1) - 1)
    def _():
        y = o_ref[...]
        o_ref[...] = jnp.maximum(y, 0.0) + y


def _gnn_axw_kernel(a_ref, x_ref, w_ref, o_ref, acc_ref):
    """acc = A @ X (f32 accumulator); epilogue: y = acc @ W, out = relu(y)+y."""
    k = pl.program_id(1)

    @pl.when(k == 0)
    def _():
        acc_ref[...] = jnp.zeros_like(acc_ref)

    acc_ref[...] += jnp.dot(a_ref[...], x_ref[...],
                            preferred_element_type=jnp.float32)

    @pl.when(k == pl.num_programs(1) - 1)
    def _():
        y = jnp.dot(acc_ref[...], w_ref[...],
                    preferred_element_type=jnp.float32)
        o_ref[...] = jnp.maximum(y, 0.0) + y


# ---------------------------------------------------------------------------
# JAX glue: densify edge_index into the gcn_norm adjacency (padded, any dtype)
# ---------------------------------------------------------------------------
def gcn_norm_dense(edge_index, num_nodes, *, n_rows_p=None, n_cols_p=None,
                   dtype=jnp.float32):
    """A_hat[target, source] = deg(target)^-1/2 * deg(source)^-1/2.

    Matches PyG gcn_norm with edge_weight=1, improved=False,
    add_self_loops=False, flow='source_to_target'.  The scatter target is
    allocated directly at the padded size/dtype (no extra O(N^2) pad copy).
    """
    n_rows_p = num_nodes if n_rows_p is None else n_rows_p
    n_cols_p = num_nodes if n_cols_p is None else n_cols_p
    row = edge_index[0]  # source
    col = edge_index[1]  # target
    ones = jnp.ones(row.shape[0], dtype=jnp.float32)
    deg = jnp.zeros((num_nodes,), jnp.float32).at[col].add(ones)
    deg_inv_sqrt = jnp.where(deg > 0.0, jax.lax.rsqrt(deg), 0.0)
    vals = (deg_inv_sqrt[row] * deg_inv_sqrt[col]).astype(dtype)
    a_hat = jnp.zeros((n_rows_p, n_cols_p), dtype).at[col, row].add(vals)
    return a_hat


# ---------------------------------------------------------------------------
# Tiling heuristics
# ---------------------------------------------------------------------------
def _pick_row_tile(n_rows_p):
    # 256-aligned tiles for the v6e/v7x 2x256x256 MXU when big enough, while
    # keeping >= 2 row tiles so the "parallel" axis shards across v7x's 2 TCs.
    if n_rows_p >= 1024 and n_rows_p % 512 == 0:
        return 512
    if n_rows_p >= 512 and n_rows_p % 256 == 0:
        return 256
    return 128


def _pick_k_tile(n, tk_cap):
    """Contraction tile + padded K extent.  Prefers large tiles (>= 512) and
    pads K up rather than shrinking the tile to 128."""
    n128 = _round_up(n, 128)
    if n128 <= tk_cap:
        return n128, n128                       # single k step
    t = tk_cap - tk_cap % 128
    while t >= 512:                             # largest 128-multiple divisor >= 512
        if n128 % t == 0:
            return t, n128
        t -= 128
    return tk_cap, _round_up(n, tk_cap)         # pad K to a multiple of the tile


def _ah_footprint(tm, tk, cout_p):
    return (2 * tm * tk * 2          # A bf16, double-buffered
            + 2 * tk * cout_p * 2    # H bf16, double-buffered
            + 2 * tm * cout_p * 4)   # out f32, resident + writeback


def _axw_footprint(tm, tk, cin_p, cout_p):
    return (2 * tm * tk * 2          # A bf16
            + 2 * tk * cin_p * 2     # X bf16
            + 2 * cin_p * cout_p * 4  # W f32 resident
            + 2 * tm * cout_p * 4    # out f32
            + tm * cin_p * 4)        # acc scratch f32


# ---------------------------------------------------------------------------
# Forward wrapper
# ---------------------------------------------------------------------------
def gnn_block_forward(x, edge_index, w, *, tk_max=2048,
                      vmem_budget_bytes=36 * 1024 * 1024):
    """GNNBlock forward. x: [N, Cin] f32, edge_index: [2, E] i32, w: [Cin, Cout]."""
    n, cin = x.shape
    cout = w.shape[1]

    cin_p = _round_up(cin, 128)
    cout_p = _round_up(cout, 128)
    n_rows_p = _round_up(n, 128)
    tm = _pick_row_tile(n_rows_p)

    # Decide the algebraic path on PADDED channel counts.
    use_axw = cin_p < cout_p

    # Contraction tile: start big, shrink until the live footprint fits budget.
    tk_cap = tk_max
    while True:
        tk, n_k_p = _pick_k_tile(n, tk_cap)
        fp = (_axw_footprint(tm, tk, cin_p, cout_p) if use_axw
              else _ah_footprint(tm, tk, cout_p))
        if fp <= vmem_budget_bytes or (tk_cap <= 512 and tm <= 128):
            break
        if tk_cap > 512:
            tk_cap //= 2
        else:
            tm //= 2

    grid = (n_rows_p // tm, n_k_p // tk)
    out_shape = jax.ShapeDtypeStruct((n_rows_p, cout_p), jnp.float32)
    compiler_params = pltpu.CompilerParams(
        dimension_semantics=("parallel", "arbitrary"),
        # 48 MiB fits under v7x's 64 MiB physical VMEM with headroom and raises
        # v5e's 16 MiB scoped default so the larger tiles compile everywhere.
        vmem_limit_bytes=48 * 1024 * 1024,
    )

    # bf16 adjacency, built directly at padded size (rows padded for the row
    # grid, cols padded for the contraction grid).
    a_p = gcn_norm_dense(edge_index, n, n_rows_p=n_rows_p, n_cols_p=n_k_p,
                         dtype=jnp.bfloat16)
    # TODO(synk): sparse graphs -> block-CSR scalar-prefetch gather (see header).

    if use_axw:
        # y = (A @ X) @ W : dominant term N^2 * cin_p  (cin_p < cout_p).
        x_p = jnp.pad(x.astype(jnp.bfloat16),
                      ((0, n_k_p - n), (0, cin_p - cin)))
        w_p = jnp.pad(w.astype(jnp.float32),
                      ((0, cin_p - cin), (0, cout_p - cout)))
        cost = pl.CostEstimate(
            flops=2 * n_rows_p * n_k_p * cin_p + 2 * n_rows_p * cin_p * cout_p,
            transcendentals=0,
            bytes_accessed=(2 * n_rows_p * n_k_p + 2 * n_k_p * cin_p
                            + 4 * cin_p * cout_p + 4 * n_rows_p * cout_p),
        )
        out_p = pl.pallas_call(
            _gnn_axw_kernel,
            out_shape=out_shape,
            grid_spec=pltpu.PrefetchScalarGridSpec(
                num_scalar_prefetch=0,
                grid=grid,
                in_specs=[
                    pl.BlockSpec((tm, tk), lambda i, k: (i, k)),
                    pl.BlockSpec((tk, cin_p), lambda i, k: (k, 0)),
                    pl.BlockSpec((cin_p, cout_p), lambda i, k: (0, 0)),
                ],
                out_specs=pl.BlockSpec((tm, cout_p), lambda i, k: (i, 0)),
                scratch_shapes=[pltpu.VMEM((tm, cin_p), jnp.float32)],
            ),
            compiler_params=compiler_params,
            cost_estimate=cost,
        )(a_p, x_p, w_p)
    else:
        # cout_p <= cin_p: precompute H = X @ W once in f32 (cheap,
        # O(N*cin*cout)), aggregate A @ H in the kernel.  W never occupies
        # hot-loop VMEM and there is no epilogue matmul.
        h = jnp.dot(x.astype(jnp.float32), w.astype(jnp.float32),
                    preferred_element_type=jnp.float32)
        h_p = jnp.pad(h.astype(jnp.bfloat16),
                      ((0, n_k_p - n), (0, cout_p - cout)))
        cost = pl.CostEstimate(
            flops=2 * n_rows_p * n_k_p * cout_p,
            transcendentals=0,
            bytes_accessed=(2 * n_rows_p * n_k_p + 2 * n_k_p * cout_p
                            + 4 * n_rows_p * cout_p),
        )
        out_p = pl.pallas_call(
            _gnn_ah_kernel,
            out_shape=out_shape,
            grid_spec=pltpu.PrefetchScalarGridSpec(
                num_scalar_prefetch=0,
                grid=grid,
                in_specs=[
                    pl.BlockSpec((tm, tk), lambda i, k: (i, k)),
                    pl.BlockSpec((tk, cout_p), lambda i, k: (k, 0)),
                ],
                out_specs=pl.BlockSpec((tm, cout_p), lambda i, k: (i, 0)),
            ),
            compiler_params=compiler_params,
            cost_estimate=cost,
        )(a_p, h_p)

    return out_p[:n, :cout]


def reference_forward(x, edge_index, w):
    a_hat = gcn_norm_dense(edge_index, x.shape[0])  # f32, unpadded
    y = a_hat @ (x @ w)
    return jnp.maximum(y, 0.0) + y


if __name__ == "__main__":
    key = jax.random.PRNGKey(0)
    k_x, k_e, k_w = jax.random.split(key, 3)

    num_nodes = 16
    in_channels = 8
    out_channels = 32
    num_edges = 40

    # Deterministic synthetic graph + parameters.
    x = jax.random.normal(k_x, (num_nodes, in_channels), dtype=jnp.float32)
    edge_index = jax.random.randint(
        k_e, (2, num_edges), minval=0, maxval=num_nodes, dtype=jnp.int32
    )
    # edge_attr exists on the Data object but is unused by GCNConv's forward.
    edge_attr = jax.random.normal(key, (num_edges, 4), dtype=jnp.float32)  # noqa: F841

    # Glorot-normal init of the GCNConv weight (bias=False).
    std = (2.0 / (in_channels + out_channels)) ** 0.5
    w = std * jax.random.normal(k_w, (in_channels, out_channels), dtype=jnp.float32)

    out = gnn_block_forward(x, edge_index, w)
    out = jax.block_until_ready(out)

    ref = reference_forward(x, edge_index, w)
    assert out.shape == (num_nodes, out_channels)
    # Tolerance loosened vs. the pure-f32 version: A_hat and H are streamed in
    # bf16 (f32 accumulation), so expect ~1e-3 absolute error.
    assert jnp.allclose(out, ref, atol=2e-2, rtol=2e-2)

    print("KERNEL_OK")
</pallas_src>

<mosaic_0001>
module attributes {stable_mosaic.version = 11 : i64} {
  func.func @_gnn_ah_kernel(%arg0: i32, %arg1: i32, %arg2: memref<128x128xbf16, #tpu.memory_space<vmem>>, %arg3: memref<128x128xbf16, #tpu.memory_space<vmem>>, %arg4: memref<128x128xf32, #tpu.memory_space<vmem>>) attributes {dimension_semantics = [#tpu.dimension_semantics<parallel>, #tpu.dimension_semantics<arbitrary>], iteration_bounds = array<i64: 1, 1>, scalar_prefetch = 0 : i64, scratch_operands = 0 : i64, tpu.core_type = #tpu.core_type<tc>, window_params = [{transform_indices = @transform_0, window_bounds = array<i64: 128, 128>}, {transform_indices = @transform_1, window_bounds = array<i64: 128, 128>}, {transform_indices = @transform_2, window_bounds = array<i64: 128, 128>}]} {
    %c0_i32 = arith.constant 0 : i32
    %0 = arith.cmpi eq, %arg1, %c0_i32 : i32
    %1 = arith.extui %0 : i1 to i32
    %c0_i32_0 = arith.constant 0 : i32
    %2 = arith.cmpi ne, %1, %c0_i32_0 : i32
    scf.if %2 {
      %cst_10 = arith.constant 0.000000e+00 : f32
      %12 = vector.broadcast %cst_10 : f32 to vector<128x128xf32>
      %c0_11 = arith.constant 0 : index
      %c0_12 = arith.constant 0 : index
      %13 = vector.load %arg4[%c0_11, %c0_12] : memref<128x128xf32, #tpu.memory_space<vmem>>, vector<128x128xf32>
      tpu.vector_store %arg4[%c0_11, %c0_12], %12 {strides = array<i32>} : memref<128x128xf32, #tpu.memory_space<vmem>>, vector<128x128xf32>,
    } else {
    }
    %c0 = arith.constant 0 : index
    %c0_1 = arith.constant 0 : index
    %3 = vector.load %arg4[%c0, %c0_1] : memref<128x128xf32, #tpu.memory_space<vmem>>, vector<128x128xf32>
    %c0_2 = arith.constant 0 : index
    %c0_3 = arith.constant 0 : index
    %4 = vector.load %arg2[%c0_2, %c0_3] : memref<128x128xbf16, #tpu.memory_space<vmem>>, vector<128x128xbf16>
    %c0_4 = arith.constant 0 : index
    %c0_5 = arith.constant 0 : index
    %5 = vector.load %arg3[%c0_4, %c0_5] : memref<128x128xbf16, #tpu.memory_space<vmem>>, vector<128x128xbf16>
    %cst = arith.constant dense<0.000000e+00> : vector<128x128xf32>
    %6 = tpu.matmul %4, %5, %cst {dimension_numbers = #tpu.dot_dimension_numbers<[1], [0], [0], [1], [0, 0, 1, 1], [], []>} : vector<128x128xbf16>, vector<128x128xbf16>, vector<128x128xf32> -> vector<128x128xf32>
    %7 = arith.addf %3, %6 : vector<128x128xf32>
    %c0_6 = arith.constant 0 : index
    %c0_7 = arith.constant 0 : index
    %8 = vector.load %arg4[%c0_6, %c0_7] : memref<128x128xf32, #tpu.memory_space<vmem>>, vector<128x128xf32>
    tpu.vector_store %arg4[%c0_6, %c0_7], %7 {strides = array<i32>} : memref<128x128xf32, #tpu.memory_space<vmem>>, vector<128x128xf32>,
    %c0_i32_8 = arith.constant 0 : i32
    %9 = arith.cmpi eq, %arg1, %c0_i32_8 : i32
    %10 = arith.extui %9 : i1 to i32
    %c0_i32_9 = arith.constant 0 : i32
    %11 = arith.cmpi ne, %10, %c0_i32_9 : i32
    scf.if %11 {
      %c0_10 = arith.constant 0 : index
      %c0_11 = arith.constant 0 : index
      %12 = vector.load %arg4[%c0_10, %c0_11] : memref<128x128xf32, #tpu.memory_space<vmem>>, vector<128x128xf32>
      %cst_12 = arith.constant 0.000000e+00 : f32
      %13 = vector.broadcast %cst_12 : f32 to vector<128x128xf32>
      %14 = arith.maximumf %12, %13 : vector<128x128xf32>
      %15 = arith.addf %14, %12 : vector<128x128xf32>
      %c0_13 = arith.constant 0 : index
      %c0_14 = arith.constant 0 : index
      %16 = vector.load %arg4[%c0_13, %c0_14] : memref<128x128xf32, #tpu.memory_space<vmem>>, vector<128x128xf32>
      tpu.vector_store %arg4[%c0_13, %c0_14], %15 {strides = array<i32>} : memref<128x128xf32, #tpu.memory_space<vmem>>, vector<128x128xf32>,
    } else {
    }
    return
  }
  func.func @transform_0(%arg0: i32, %arg1: i32) -> (i32, i32) {
    %c0_i32 = arith.constant 0 : i32
    return %arg0, %arg1 : i32, i32
  }
  func.func @transform_1(%arg0: i32, %arg1: i32) -> (i32, i32) {
    %c0_i32 = arith.constant 0 : i32
    %c0_i32_0 = arith.constant 0 : i32
    return %arg1, %c0_i32 : i32, i32
  }
  func.func @transform_2(%arg0: i32, %arg1: i32) -> (i32, i32) {
    %c0_i32 = arith.constant 0 : i32
    %c0_i32_0 = arith.constant 0 : i32
    return %arg0, %c0_i32 : i32, i32
  }
}

</mosaic_0001>

<llo_original>
// kernel: tpu_custom_call.1
$region0: #{tpu_custom_call.1}
  #allocation0 [shape = 'u32[]', space=smem, size = 0x4, offset = 0x4, fixed_abs, tag = 'smem constant byte address 0x4 - core index']
  #allocation1 [shape = 'u32[144,128]{1,0:T(1,128)}', space=vmem, size = 0x12000, scoped, tag = 'internal scratch']
  %s0 = inlined_call_operand.hbm [shape: bf16[128,128], index: 0, kind: input, shape index: {}]
  %s1 = inlined_call_operand.hbm [shape: bf16[128,128], index: 1, kind: input, shape index: {}]
  %s2 = inlined_call_operand.hbm [shape: f32[128,128], index: 2, kind: output, shape index: {}]
  %s3 = sld [smem:[#allocation0]]
  $region34: #{tpu_custom_call.1} parent=0
    _
  %s5 = ssub.s32 1, %s3
  %s6 = scalar_select 0, %s5, %s3
  $region1: #{tpu_custom_call.1} parent=0
    #allocation2 [shape = 'u8[32768]{0}', space=vmem, size = 0x8000, scoped, tag = 'input window, operand 0, single buffered']
    #allocation3 [shape = 's32[1]{0}', space=sflag, size = 0x4, scoped, tag = 'scoped memory for tpu_custom_call.1']
    #allocation4 [shape = 's32[1]{0}', space=sflag, size = 0x4, scoped, tag = 'scoped memory for tpu_custom_call.1']
    #allocation5 [shape = 'u8[32768]{0}', space=vmem, size = 0x8000, scoped, tag = 'input window, operand 1, single buffered']
    #allocation6 [shape = 's32[1]{0}', space=sflag, size = 0x4, scoped, tag = 'scoped memory for tpu_custom_call.1']
    #allocation7 [shape = 'u8[65536]{0}', space=vmem, size = 0x10000, scoped, tag = 'output window, operand 0, single buffered']
    %7 = vsyncpa [#allocation3], 0
    %8 = vsyncpa [#allocation6], 0
    %9 = vsyncpa [#allocation4], 0
    // Predicated region
    $region2: #{tpu_custom_call.1} parent=1 // pred_check
      _
    $region3: #{tpu_custom_call.1} parent=1 // pred_check_branch
      %11 = sbr.rel (0) target = $region5
    $region4: #{tpu_custom_call.1} parent=1 // pred_region
      %s13 = ssub.s32 1024, 1024
      %14 = vsyncadd [#allocation3], %s13
      %s15 = sshll.u32 [#allocation2], 4
      %s16 = int_to_ptr.vmem [resolvable:$true] %s15
      %21 = dma.hbm_to_vmem [thread:$0]  %s0, 1024, %s16, [#allocation3], 64, 64, 4
    $region5: #{tpu_custom_call.1} parent=1 // pred_fallthru
      _
    // Predicated region
    $region6: #{tpu_custom_call.1} parent=1 // pred_check
      _
    $region7: #{tpu_custom_call.1} parent=1 // pred_check_branch
      %23 = sbr.rel (0) target = $region9
    $region8: #{tpu_custom_call.1} parent=1 // pred_region
      %s25 = ssub.s32 1024, 1024
      %26 = vsyncadd [#allocation6], %s25
      %s27 = sshll.u32 [#allocation5], 4
      %s28 = int_to_ptr.vmem [resolvable:$true] %s27
      %33 = dma.hbm_to_vmem [thread:$0]  %s1, 1024, %s28, [#allocation6], 64, 64, 4
    $region9: #{tpu_custom_call.1} parent=1 // pred_fallthru
      _
    // Predicated region
    $region10: #{tpu_custom_call.1} parent=1 // pred_check
      _
    $region11: #{tpu_custom_call.1} parent=1 // pred_check_branch
      %35 = sbr.rel (0) target = $region13
    $region12: #{tpu_custom_call.1} parent=1 // pred_region
      %36 = dma.done [#allocation3], 1024
    $region13: #{tpu_custom_call.1} parent=1 // pred_fallthru
      _
    // Predicated region
    $region14: #{tpu_custom_call.1} parent=1 // pred_check
      _
    $region15: #{tpu_custom_call.1} parent=1 // pred_check_branch
      %38 = sbr.rel (0) target = $region17
    $region16: #{tpu_custom_call.1} parent=1 // pred_region
      %39 = dma.done [#allocation6], 1024
    $region17: #{tpu_custom_call.1} parent=1 // pred_fallthru
      _
    %p41 = scmp.eq.s32.totalorder 0, 0
    // Predicated region
    $region18: #{tpu_custom_call.1} parent=1 // pred_check
      %p42 = pneg %p41
    $region19: #{tpu_custom_call.1} parent=1 // pred_check_branch
      %44 = sbr.rel (%p42) target = $region21
    $region20: #{tpu_custom_call.1} parent=1 // pred_region
      %45 = vst [vmem:[#allocation7] sm:$0xff] 0.0
      %46 = vst [vmem:[#allocation7 + $0x8] sm:$0xff] 0.0
      %47 = vst [vmem:[#allocation7 + $0x10] sm:$0xff] 0.0
      %48 = vst [vmem:[#allocation7 + $0x18] sm:$0xff] 0.0
      %49 = vst [vmem:[#allocation7 + $0x20] sm:$0xff] 0.0
      %50 = vst [vmem:[#allocation7 + $0x28] sm:$0xff] 0.0
      %51 = vst [vmem:[#allocation7 + $0x30] sm:$0xff] 0.0
      %52 = vst [vmem:[#allocation7 + $0x38] sm:$0xff] 0.0
      %53 = vst [vmem:[#allocation7 + $0x40] sm:$0xff] 0.0
      %54 = vst [vmem:[#allocation7 + $0x48] sm:$0xff] 0.0
      %55 = vst [vmem:[#allocation7 + $0x50] sm:$0xff] 0.0
      %56 = vst [vmem:[#allocation7 + $0x58] sm:$0xff] 0.0
      %57 = vst [vmem:[#allocation7 + $0x60] sm:$0xff] 0.0
      %58 = vst [vmem:[#allocation7 + $0x68] sm:$0xff] 0.0
      %59 = vst [vmem:[#allocation7 + $0x70] sm:$0xff] 0.0
      %60 = vst [vmem:[#allocation7 + $0x78] sm:$0xff] 0.0
    $region21: #{tpu_custom_call.1} parent=1 // pred_fallthru
      _
    %v61 = vld [vmem:[#allocation7] sm:$0xff]
    %v62 = vld [vmem:[#allocation7 + $0x8] sm:$0xff]
    %v63 = vld [vmem:[#allocation7 + $0x10] sm:$0xff]
    %v64 = vld [vmem:[#allocation7 + $0x18] sm:$0xff]
    %v65 = vld [vmem:[#allocation7 + $0x20] sm:$0xff]
    %v66 = vld [vmem:[#allocation7 + $0x28] sm:$0xff]
    %v67 = vld [vmem:[#allocation7 + $0x30] sm:$0xff]
    %v68 = vld [vmem:[#allocation7 + $0x38] sm:$0xff]
    %v69 = vld [vmem:[#allocation7 + $0x40] sm:$0xff]
    %v70 = vld [vmem:[#allocation7 + $0x48] sm:$0xff]
    %v71 = vld [vmem:[#allocation7 + $0x50] sm:$0xff]
    %v72 = vld [vmem:[#allocation7 + $0x58] sm:$0xff]
    %v73 = vld [vmem:[#allocation7 + $0x60] sm:$0xff]
    %v74 = vld [vmem:[#allocation7 + $0x68] sm:$0xff]
    %v75 = vld [vmem:[#allocation7 + $0x70] sm:$0xff]
    %v76 = vld [vmem:[#allocation7 + $0x78] sm:$0xff]
    %v77 = vld [vmem:[#allocation2] sm:$0xf]
    %v78 = vld [vmem:[#allocation2 + $0x4] sm:$0xf]
    %v79 = vld [vmem:[#allocation2 + $0x8] sm:$0xf]
    %v80 = vld [vmem:[#allocation2 + $0xc] sm:$0xf]
    %v81 = vld [vmem:[#allocation2 + $0x10] sm:$0xf]
    %v82 = vld [vmem:[#allocation2 + $0x14] sm:$0xf]
    %v83 = vld [vmem:[#allocation2 + $0x18] sm:$0xf]
    %v84 = vld [vmem:[#allocation2 + $0x1c] sm:$0xf]
    %v85 = vld [vmem:[#allocation2 + $0x20] sm:$0xf]
    %v86 = vld [vmem:[#allocation2 + $0x24] sm:$0xf]
    %v87 = vld [vmem:[#allocation2 + $0x28] sm:$0xf]
    %v88 = vld [vmem:[#allocation2 + $0x2c] sm:$0xf]
    %v89 = vld [vmem:[#allocation2 + $0x30] sm:$0xf]
    %v90 = vld [vmem:[#allocation2 + $0x34] sm:$0xf]
    %v91 = vld [vmem:[#allocation2 + $0x38] sm:$0xf]
    %v92 = vld [vmem:[#allocation2 + $0x3c] sm:$0xf]
    %v93 = vld [vmem:[#allocation5] sm:$0xf]
    %v94 = vld [vmem:[#allocation5 + $0x4] sm:$0xf]
    %v95 = vld [vmem:[#allocation5 + $0x8] sm:$0xf]
    %v96 = vld [vmem:[#allocation5 + $0xc] sm:$0xf]
    %v97 = vld [vmem:[#allocation5 + $0x10] sm:$0xf]
    %v98 = vld [vmem:[#allocation5 + $0x14] sm:$0xf]
    %v99 = vld [vmem:[#allocation5 + $0x18] sm:$0xf]
    %v100 = vld [vmem:[#allocation5 + $0x1c] sm:$0xf]
    %v101 = vld [vmem:[#allocation5 + $0x20] sm:$0xf]
    %v102 = vld [vmem:[#allocation5 + $0x24] sm:$0xf]
    %v103 = vld [vmem:[#allocation5 + $0x28] sm:$0xf]
    %v104 = vld [vmem:[#allocation5 + $0x2c] sm:$0xf]
    %v105 = vld [vmem:[#allocation5 + $0x30] sm:$0xf]
    %v106 = vld [vmem:[#allocation5 + $0x34] sm:$0xf]
    %v107 = vld [vmem:[#allocation5 + $0x38] sm:$0xf]
    %v108 = vld [vmem:[#allocation5 + $0x3c] sm:$0xf]
    %v125 = vunpack.c.l.b16 %v77
    %v126 = vunpack.c.l.b16 %v78
    %v127 = vunpack.c.l.b16 %v79
    %v128 = vunpack.c.l.b16 %v80
    %v129 = vunpack.c.l.b16 %v81
    %v130 = vunpack.c.l.b16 %v82
    %v131 = vunpack.c.l.b16 %v83
    %v132 = vunpack.c.l.b16 %v84
    %v133 = vunpack.c.l.b16 %v85
    %v134 = vunpack.c.l.b16 %v86
    %v135 = vunpack.c.l.b16 %v87
    %v136 = vunpack.c.l.b16 %v88
    %v137 = vunpack.c.l.b16 %v89
    %v138 = vunpack.c.l.b16 %v90
    %v139 = vunpack.c.l.b16 %v91
    %v140 = vunpack.c.l.b16 %v92
    %v141 = vpack.c.b16 %v126, %v125
    %v142 = vpack.c.b16 %v128, %v127
    %v143 = vpack.c.b16 %v130, %v129
    %v144 = vpack.c.b16 %v132, %v131
    %v145 = vpack.c.b16 %v134, %v133
    %v146 = vpack.c.b16 %v136, %v135
    %v147 = vpack.c.b16 %v138, %v137
    %v148 = vpack.c.b16 %v140, %v139
    %v173 = vunpack.c.l.b16 %v93
    %v174 = vunpack.c.l.b16 %v94
    %v175 = vunpack.c.l.b16 %v95
    %v176 = vunpack.c.l.b16 %v96
    %v177 = vunpack.c.l.b16 %v97
    %v178 = vunpack.c.l.b16 %v98
    %v179 = vunpack.c.l.b16 %v99
    %v180 = vunpack.c.l.b16 %v100
    %v181 = vunpack.c.l.b16 %v101
    %v182 = vunpack.c.l.b16 %v102
    %v183 = vunpack.c.l.b16 %v103
    %v184 = vunpack.c.l.b16 %v104
    %v185 = vunpack.c.l.b16 %v105
    %v186 = vunpack.c.l.b16 %v106
    %v187 = vunpack.c.l.b16 %v107
    %v188 = vunpack.c.l.b16 %v108
    %v189 = vpack.c.b16 %v174, %v173
    %v190 = vpack.c.b16 %v176, %v175
    %v191 = vpack.c.b16 %v178, %v177
    %v192 = vpack.c.b16 %v180, %v179
    %v193 = vpack.c.b16 %v182, %v181
    %v194 = vpack.c.b16 %v184, %v183
    %v195 = vpack.c.b16 %v186, %v185
    %v196 = vpack.c.b16 %v188, %v187
    %205 = vmatprep.subr.bf16.mxu0 0
    %206 = vmatpush1.bf16.msra.mxu0 %v189
    %207 = vmatprep.subr.bf16.mxu0 0
    %208 = vmatpush1.bf16.msra.mxu0 %v190
    %209 = vmatprep.subr.bf16.mxu0 0
    %210 = vmatpush1.bf16.msra.mxu0 %v191
    %211 = vmatprep.subr.bf16.mxu0 0
    %212 = vmatpush1.bf16.msra.mxu0 %v192
    %213 = vmatprep.subr.bf16.mxu0 0
    %214 = vmatpush1.bf16.msra.mxu0 %v193
    %215 = vmatprep.subr.bf16.mxu0 0
    %216 = vmatpush1.bf16.msra.mxu0 %v194
    %217 = vmatprep.subr.bf16.mxu0 0
    %218 = vmatpush1.bf16.msra.mxu0 %v195
    %219 = vmatprep.subr.bf16.mxu0 0
    %220 = vmatpush1.bf16.msra.mxu0 %v196
    %221 = vmatprep.subr.bf16.mxu0 0
    %222 = vmatpush1.bf16.msra.mxu0 0
    %223 = vmatprep.subr.bf16.mxu0 0
    %224 = vmatpush1.bf16.msra.mxu0 0
    %225 = vmatprep.subr.bf16.mxu0 0
    %226 = vmatpush1.bf16.msra.mxu0 0
    %227 = vmatprep.subr.bf16.mxu0 0
    %228 = vmatpush1.bf16.msra.mxu0 0
    %229 = vmatprep.subr.bf16.mxu0 0
    %230 = vmatpush1.bf16.msra.mxu0 0
    %231 = vmatprep.subr.bf16.mxu0 0
    %232 = vmatpush1.bf16.msra.mxu0 0
    %233 = vmatprep.subr.bf16.mxu0 0
    %234 = vmatpush1.bf16.msra.mxu0 0
    %235 = vmatprep.subr.bf16.mxu0 0
    %236 = vmatpush1.bf16.msra.mxu0 0
    %237 = vmatprep.mubr.bf16.mxu0 0
    %238 = vmatmul.mubr.bf16.gmra.mrb[0].mxu0 %v141
    %v239 = vpop.f32.mrb[0].mxu0
    %v240 = vadd.f32 0.0, %v239
    %v241 = vpop.f32.mrb[0].mxu0
    %v242 = vpop.f32.mrb[0].mxu0
    %v243 = vadd.f32 0.0, %v242
    %v244 = vpop.f32.mrb[0].mxu0
    %245 = vmatprep.mubr.bf16.mxu0 0
    %246 = vmatmul.mubr.bf16.gmra.mrb[0].mxu0 %v142
    %v247 = vpop.f32.mrb[0].mxu0
    %v248 = vadd.f32 0.0, %v247
    %v249 = vpop.f32.mrb[0].mxu0
    %v250 = vpop.f32.mrb[0].mxu0
    %v251 = vadd.f32 0.0, %v250
    %v252 = vpop.f32.mrb[0].mxu0
    %253 = vmatprep.mubr.bf16.mxu0 0
    %254 = vmatmul.mubr.bf16.gmra.mrb[0].mxu0 %v143
    %v255 = vpop.f32.mrb[0].mxu0
    %v256 = vadd.f32 0.0, %v255
    %v257 = vpop.f32.mrb[0].mxu0
    %v258 = vpop.f32.mrb[0].mxu0
    %v259 = vadd.f32 0.0, %v258
    %v260 = vpop.f32.mrb[0].mxu0
    %261 = vmatprep.mubr.bf16.mxu0 0
    %262 = vmatmul.mubr.bf16.gmra.mrb[0].mxu0 %v144
    %v263 = vpop.f32.mrb[0].mxu0
    %v264 = vadd.f32 0.0, %v263
    %v265 = vpop.f32.mrb[0].mxu0
    %v266 = vpop.f32.mrb[0].mxu0
    %v267 = vadd.f32 0.0, %v266
    %v268 = vpop.f32.mrb[0].mxu0
    %269 = vmatprep.mubr.bf16.mxu0 0
    %270 = vmatmul.mubr.bf16.gmra.mrb[0].mxu0 %v145
    %v271 = vpop.f32.mrb[0].mxu0
    %v272 = vadd.f32 0.0, %v271
    %v273 = vpop.f32.mrb[0].mxu0
    %v274 = vpop.f32.mrb[0].mxu0
    %v275 = vadd.f32 0.0, %v274
    %v276 = vpop.f32.mrb[0].mxu0
    %277 = vmatprep.mubr.bf16.mxu0 0
    %278 = vmatmul.mubr.bf16.gmra.mrb[0].mxu0 %v146
    %v279 = vpop.f32.mrb[0].mxu0
    %v280 = vadd.f32 0.0, %v279
    %v281 = vpop.f32.mrb[0].mxu0
    %v282 = vpop.f32.mrb[0].mxu0
    %v283 = vadd.f32 0.0, %v282
    %v284 = vpop.f32.mrb[0].mxu0
    %285 = vmatprep.mubr.bf16.mxu0 0
    %286 = vmatmul.mubr.bf16.gmra.mrb[0].mxu0 %v147
    %v287 = vpop.f32.mrb[0].mxu0
    %v288 = vadd.f32 0.0, %v287
    %v289 = vpop.f32.mrb[0].mxu0
    %v290 = vpop.f32.mrb[0].mxu0
    %v291 = vadd.f32 0.0, %v290
    %v292 = vpop.f32.mrb[0].mxu0
    %293 = vmatprep.mubr.bf16.mxu0 0
    %294 = vmatmul.mubr.bf16.gmra.mrb[0].mxu0 %v148
    %v295 = vpop.f32.mrb[0].mxu0
    %v296 = vadd.f32 0.0, %v295
    %v297 = vpop.f32.mrb[0].mxu0
    %v298 = vpop.f32.mrb[0].mxu0
    %v299 = vadd.f32 0.0, %v298
    %v300 = vpop.f32.mrb[0].mxu0
    %301 = vdwg.mxu0
    %v302 = vadd.f32 %v61, %v240
    %v303 = vadd.f32 %v62, %v243
    %v304 = vadd.f32 %v63, %v248
    %v305 = vadd.f32 %v64, %v251
    %v306 = vadd.f32 %v65, %v256
    %v307 = vadd.f32 %v66, %v259
    %v308 = vadd.f32 %v67, %v264
    %v309 = vadd.f32 %v68, %v267
    %v310 = vadd.f32 %v69, %v272
    %v311 = vadd.f32 %v70, %v275
    %v312 = vadd.f32 %v71, %v280
    %v313 = vadd.f32 %v72, %v283
    %v314 = vadd.f32 %v73, %v288
    %v315 = vadd.f32 %v74, %v291
    %v316 = vadd.f32 %v75, %v296
    %v317 = vadd.f32 %v76, %v299
    %318 = vst [vmem:[#allocation7] sm:$0xff] %v302
    %319 = vst [vmem:[#allocation7 + $0x8] sm:$0xff] %v303
    %320 = vst [vmem:[#allocation7 + $0x10] sm:$0xff] %v304
    %321 = vst [vmem:[#allocation7 + $0x18] sm:$0xff] %v305
    %322 = vst [vmem:[#allocation7 + $0x20] sm:$0xff] %v306
    %323 = vst [vmem:[#allocation7 + $0x28] sm:$0xff] %v307
    %324 = vst [vmem:[#allocation7 + $0x30] sm:$0xff] %v308
    %325 = vst [vmem:[#allocation7 + $0x38] sm:$0xff] %v309
    %326 = vst [vmem:[#allocation7 + $0x40] sm:$0xff] %v310
    %327 = vst [vmem:[#allocation7 + $0x48] sm:$0xff] %v311
    %328 = vst [vmem:[#allocation7 + $0x50] sm:$0xff] %v312
    %329 = vst [vmem:[#allocation7 + $0x58] sm:$0xff] %v313
    %330 = vst [vmem:[#allocation7 + $0x60] sm:$0xff] %v314
    %331 = vst [vmem:[#allocation7 + $0x68] sm:$0xff] %v315
    %332 = vst [vmem:[#allocation7 + $0x70] sm:$0xff] %v316
    %333 = vst [vmem:[#allocation7 + $0x78] sm:$0xff] %v317
    // Predicated region
    $region22: #{tpu_custom_call.1} parent=1 // pred_check
      %p334 = pneg %p41
    $region23: #{tpu_custom_call.1} parent=1 // pred_check_branch
      %336 = sbr.rel (%p334) target = $region25
    $region24: #{tpu_custom_call.1} parent=1 // pred_region
      %v337 = vld [vmem:[#allocation7] sm:$0xff]
      %v338 = vld [vmem:[#allocation7 + $0x8] sm:$0xff]
      %v339 = vld [vmem:[#allocation7 + $0x10] sm:$0xff]
      %v340 = vld [vmem:[#allocation7 + $0x18] sm:$0xff]
      %v341 = vld [vmem:[#allocation7 + $0x20] sm:$0xff]
      %v342 = vld [vmem:[#allocation7 + $0x28] sm:$0xff]
      %v343 = vld [vmem:[#allocation7 + $0x30] sm:$0xff]
      %v344 = vld [vmem:[#allocation7 + $0x38] sm:$0xff]
      %v345 = vld [vmem:[#allocation7 + $0x40] sm:$0xff]
      %v346 = vld [vmem:[#allocation7 + $0x48] sm:$0xff]
      %v347 = vld [vmem:[#allocation7 + $0x50] sm:$0xff]
      %v348 = vld [vmem:[#allocation7 + $0x58] sm:$0xff]
      %v349 = vld [vmem:[#allocation7 + $0x60] sm:$0xff]
      %v350 = vld [vmem:[#allocation7 + $0x68] sm:$0xff]
      %v351 = vld [vmem:[#allocation7 + $0x70] sm:$0xff]
      %v352 = vld [vmem:[#allocation7 + $0x78] sm:$0xff]
      %v353 = vmax.f32 %v337, 0.0
      %v354 = vmax.f32 %v338, 0.0
      %v355 = vmax.f32 %v339, 0.0
      %v356 = vmax.f32 %v340, 0.0
      %v357 = vmax.f32 %v341, 0.0
      %v358 = vmax.f32 %v342, 0.0
      %v359 = vmax.f32 %v343, 0.0
      %v360 = vmax.f32 %v344, 0.0
      %v361 = vmax.f32 %v345, 0.0
      %v362 = vmax.f32 %v346, 0.0
      %v363 = vmax.f32 %v347, 0.0
      %v364 = vmax.f32 %v348, 0.0
      %v365 = vmax.f32 %v349, 0.0
      %v366 = vmax.f32 %v350, 0.0
      %v367 = vmax.f32 %v351, 0.0
      %v368 = vmax.f32 %v352, 0.0
      %v369 = vadd.f32 %v353, %v337
      %v370 = vadd.f32 %v354, %v338
      %v371 = vadd.f32 %v355, %v339
      %v372 = vadd.f32 %v356, %v340
      %v373 = vadd.f32 %v357, %v341
      %v374 = vadd.f32 %v358, %v342
      %v375 = vadd.f32 %v359, %v343
      %v376 = vadd.f32 %v360, %v344
      %v377 = vadd.f32 %v361, %v345
      %v378 = vadd.f32 %v362, %v346
      %v379 = vadd.f32 %v363, %v347
      %v380 = vadd.f32 %v364, %v348
      %v381 = vadd.f32 %v365, %v349
      %v382 = vadd.f32 %v366, %v350
      %v383 = vadd.f32 %v367, %v351
      %v384 = vadd.f32 %v368, %v352
      %385 = vst [vmem:[#allocation7] sm:$0xff] %v369
      %386 = vst [vmem:[#allocation7 + $0x8] sm:$0xff] %v370
      %387 = vst [vmem:[#allocation7 + $0x10] sm:$0xff] %v371
      %388 = vst [vmem:[#allocation7 + $0x18] sm:$0xff] %v372
      %389 = vst [vmem:[#allocation7 + $0x20] sm:$0xff] %v373
      %390 = vst [vmem:[#allocation7 + $0x28] sm:$0xff] %v374
      %391 = vst [vmem:[#allocation7 + $0x30] sm:$0xff] %v375
      %392 = vst [vmem:[#allocation7 + $0x38] sm:$0xff] %v376
      %393 = vst [vmem:[#allocation7 + $0x40] sm:$0xff] %v377
      %394 = vst [vmem:[#allocation7 + $0x48] sm:$0xff] %v378
      %395 = vst [vmem:[#allocation7 + $0x50] sm:$0xff] %v379
      %396 = vst [vmem:[#allocation7 + $0x58] sm:$0xff] %v380
      %397 = vst [vmem:[#allocation7 + $0x60] sm:$0xff] %v381
      %398 = vst [vmem:[#allocation7 + $0x68] sm:$0xff] %v382
      %399 = vst [vmem:[#allocation7 + $0x70] sm:$0xff] %v383
      %400 = vst [vmem:[#allocation7 + $0x78] sm:$0xff] %v384
    $region25: #{tpu_custom_call.1} parent=1 // pred_fallthru
      _
    // Predicated region
    $region26: #{tpu_custom_call.1} parent=1 // pred_check
      _
    $region27: #{tpu_custom_call.1} parent=1 // pred_check_branch
      %402 = sbr.rel (0) target = $region29
    $region28: #{tpu_custom_call.1} parent=1 // pred_region
      %s404 = ssub.s32 2048, 2048
      %405 = vsyncadd [#allocation4], %s404
      %s406 = sshll.u32 [#allocation7], 4
      %s407 = int_to_ptr.vmem [resolvable:$true] %s406
      %412 = dma.vmem_to_hbm [thread:$0]  %s407, 2048, %s2, [#allocation4], 128, 128, 8
    $region29: #{tpu_custom_call.1} parent=1 // pred_fallthru
      _
    // Predicated region
    $region30: #{tpu_custom_call.1} parent=1 // pred_check
      _
    $region31: #{tpu_custom_call.1} parent=1 // pred_check_branch
      %414 = sbr.rel (0) target = $region33
    $region32: #{tpu_custom_call.1} parent=1 // pred_region
      %415 = dma.done [#allocation4], 2048
    $region33: #{tpu_custom_call.1} parent=1 // pred_fallthru
      _
    %416 = vsyncpa [#allocation3], 1
    %417 = vsyncpa [#allocation6], 1
    %418 = vsyncpa [#allocation4], 1

</llo_original>
